<compile_context>
chip_gen: v6e
topology: v6e:2x2x1
jax: 0.10.0
libtpu: 0.0.40
codegen_flags: <defaults>
</compile_context>

<pallas_src>
import functools

import jax
import jax.numpy as jnp
from jax.experimental import pallas as pl
from jax.experimental.pallas import tpu as pltpu


def _round_up(n, m):
    return ((n + m - 1) // m) * m


def act_layer_kernel(x_ref, w_ref, b_ref, g_ref, act_ref, logp_ref):
    tb = x_ref.shape[0]
    a_pad = w_ref.shape[1]

    # logits = x @ W + b  (MXU).  Padded action lanes carry bias -1e30.
    logits = jnp.dot(x_ref[...], w_ref[...],
                     preferred_element_type=jnp.float32) + b_ref[...]

    # ---- log-softmax pieces (row reductions over the lane axis) -------------
    m = jnp.max(logits, axis=-1, keepdims=True)
    lse = jnp.log(jnp.sum(jnp.exp(logits - m), axis=-1, keepdims=True))

    # ---- Gumbel-max sampling: argmax over perturbed logits -------------------
    perturbed = logits + g_ref[...]
    pmax = jnp.max(perturbed, axis=-1, keepdims=True)
    lane = jax.lax.broadcasted_iota(jnp.int32, (tb, a_pad), 1)
    # first lane achieving the max (ties have probability zero)
    action = jnp.min(jnp.where(perturbed >= pmax, lane, a_pad),
                     axis=-1, keepdims=True)             # (TB, 1) int32

    # ---- log-prob of the chosen action: logit[action] - m - lse --------------
    chosen = jnp.sum(jnp.where(lane == action, logits, 0.0),
                     axis=-1, keepdims=True)
    lp = chosen - m - lse

    act_ref[...] = action.astype(jnp.int32)
    logp_ref[...] = lp.astype(jnp.float32)


def pad_params(w, b, lane=128):
    """Pad the action dim to a multiple of 128 lanes (done once at init).

    Zero-padded weight columns plus a -1e30 bias guarantee padded lanes never
    win the argmax and contribute nothing to the log-sum-exp.
    """
    d, a = w.shape
    a_pad = _round_up(max(a, lane), lane)
    w_pad = jnp.pad(w, ((0, 0), (0, a_pad - a)))
    b_pad = jnp.pad(b.reshape(1, a).astype(jnp.float32),
                    ((0, 0), (0, a_pad - a)), constant_values=-1e30)
    return w_pad.astype(jnp.float32), b_pad


@functools.partial(jax.jit, static_argnames=("block_b",))
def act_layer_forward(x, w_pad, b_pad, key, *, block_b=512):
    """x: (B, D) f32, w_pad: (D, A_pad) f32, b_pad: (1, A_pad) f32, key: PRNGKey."""
    B, D = x.shape
    A_pad = w_pad.shape[1]

    tb = min(block_b, _round_up(B, 8))        # sublane-aligned batch tile
    b_total = _round_up(B, tb)
    if b_total != B:
        x = jnp.pad(x, ((0, b_total - B), (0, 0)))
    grid = (b_total // tb,)

    # Gumbel(0,1) noise generated once in the wrapper (portable across TPU /
    # interpret); padded lanes already carry a -1e30 bias so any finite noise
    # on them is harmless.
    gumbel = jax.random.gumbel(key, (b_total, A_pad), dtype=jnp.float32)

    # TODO(synk): fully lane-dense (1, TB) outputs need a transposed
    # (A_pad x TB) formulation with sublane reductions; kept (TB, 1) blocks for
    # robust lowering — output bytes are <7% of the x read at these shapes.
    acts, logps = pl.pallas_call(
        act_layer_kernel,
        out_shape=(
            jax.ShapeDtypeStruct((b_total, 1), jnp.int32),
            jax.ShapeDtypeStruct((b_total, 1), jnp.float32),
        ),
        grid_spec=pltpu.PrefetchScalarGridSpec(
            num_scalar_prefetch=0,
            grid=grid,
            in_specs=[
                pl.BlockSpec((tb, D), lambda i: (i, 0)),      # x tile slides
                pl.BlockSpec((D, A_pad), lambda i: (0, 0)),   # W resident
                pl.BlockSpec((1, A_pad), lambda i: (0, 0)),   # b resident
                pl.BlockSpec((tb, A_pad), lambda i: (i, 0)),  # gumbel tile slides
            ],
            out_specs=(
                pl.BlockSpec((tb, 1), lambda i: (i, 0)),
                pl.BlockSpec((tb, 1), lambda i: (i, 0)),
            ),
        ),
        compiler_params=pltpu.CompilerParams(
            # batch tiles are independent -> megacore sharding on v7x.
            dimension_semantics=("parallel",),
        ),
    )(x, w_pad, b_pad, gumbel)

    return acts[:B], logps[:B]


def orthogonal_init(key, rows, cols, gain):
    """Deterministic orthogonal init matching nn.init.orthogonal_ semantics."""
    n, m = (rows, cols) if rows >= cols else (cols, rows)
    a = jax.random.normal(key, (n, m), dtype=jnp.float32)
    q, r = jnp.linalg.qr(a)
    q = q * jnp.sign(jnp.diag(r))[None, :]
    if rows < cols:
        q = q.T
    return gain * q[:rows, :cols]


if __name__ == "__main__":
    key = jax.random.PRNGKey(0)
    k_x, k_w, k_sample = jax.random.split(key, 3)

    B = 8      # batch
    D = 32     # inputs_dim
    A = 16     # action_space.n (Discrete)

    # ACTLayer -> Categorical -> nn.Linear(D, A): orthogonal weight (gain 0.01),
    # zero bias.  Stored transposed (D, A) so the kernel computes x @ W + b.
    w = orthogonal_init(k_w, A, D, gain=0.01).T            # (D, A)
    b = jnp.zeros((A,), dtype=jnp.float32)
    w_pad, b_pad = pad_params(w, b)                        # (D, 128), (1, 128)

    x = jax.random.normal(k_x, (B, D), dtype=jnp.float32)

    actions, action_log_probs = act_layer_forward(x, w_pad, b_pad, k_sample)
    jax.block_until_ready((actions, action_log_probs))

    # ---- checks --------------------------------------------------------------
    assert actions.shape == (B, 1) and actions.dtype == jnp.int32
    assert action_log_probs.shape == (B, 1) and action_log_probs.dtype == jnp.float32
    assert bool(jnp.all(actions >= 0)) and bool(jnp.all(actions < A))
    assert bool(jnp.all(action_log_probs <= 0.0))

    # For whatever action was sampled, the reported log-prob must match a
    # plain-JAX log_softmax gather (sampling is stochastic, the log-prob isn't).
    ref_logits = x @ w + b[None, :]
    ref_logp = jax.nn.log_softmax(ref_logits, axis=-1)
    gathered = ref_logp[jnp.arange(B), actions[:, 0]][:, None]
    assert bool(jnp.allclose(action_log_probs, gathered, atol=1e-4, rtol=1e-4))

    print("KERNEL_OK")
</pallas_src>

<mosaic_0001>
module attributes {stable_mosaic.version = 11 : i64} {
  func.func @act_layer_kernel(%arg0: i32, %arg1: memref<8x32xf32, #tpu.memory_space<vmem>>, %arg2: memref<32x128xf32, #tpu.memory_space<vmem>>, %arg3: memref<1x128xf32, #tpu.memory_space<vmem>>, %arg4: memref<8x128xf32, #tpu.memory_space<vmem>>, %arg5: memref<8x1xi32, #tpu.memory_space<vmem>>, %arg6: memref<8x1xf32, #tpu.memory_space<vmem>>) attributes {dimension_semantics = [#tpu.dimension_semantics<parallel>], iteration_bounds = array<i64: 1>, scalar_prefetch = 0 : i64, scratch_operands = 0 : i64, tpu.core_type = #tpu.core_type<tc>, window_params = [{transform_indices = @transform_0, window_bounds = array<i64: 8, 32>}, {pipeline_mode = #tpu.pipeline_mode<synchronous>, transform_indices = @transform_1, window_bounds = array<i64: 32, 128>}, {pipeline_mode = #tpu.pipeline_mode<synchronous>, transform_indices = @transform_2, window_bounds = array<i64: 1, 128>}, {transform_indices = @transform_3, window_bounds = array<i64: 8, 128>}, {transform_indices = @transform_4, window_bounds = array<i64: 8, 1>}, {transform_indices = @transform_5, window_bounds = array<i64: 8, 1>}]} {
    %c0 = arith.constant 0 : index
    %c0_0 = arith.constant 0 : index
    %0 = vector.load %arg1[%c0, %c0_0] : memref<8x32xf32, #tpu.memory_space<vmem>>, vector<8x32xf32>
    %c0_1 = arith.constant 0 : index
    %c0_2 = arith.constant 0 : index
    %1 = vector.load %arg2[%c0_1, %c0_2] : memref<32x128xf32, #tpu.memory_space<vmem>>, vector<32x128xf32>
    %cst = arith.constant dense<0.000000e+00> : vector<8x128xf32>
    %2 = tpu.matmul %0, %1, %cst {dimension_numbers = #tpu.dot_dimension_numbers<[1], [0], [0], [1], [0, 0, 1, 1], [], []>} : vector<8x32xf32>, vector<32x128xf32>, vector<8x128xf32> -> vector<8x128xf32>
    %c0_3 = arith.constant 0 : index
    %c0_4 = arith.constant 0 : index
    %3 = vector.load %arg3[%c0_3, %c0_4] : memref<1x128xf32, #tpu.memory_space<vmem>>, vector<1x128xf32>
    %4 = vector.broadcast %3 : vector<1x128xf32> to vector<8x128xf32>
    %5 = arith.addf %2, %4 : vector<8x128xf32>
    %cst_5 = arith.constant dense<0xFF800000> : vector<8xf32>
    %6 = vector.multi_reduction <maximumf>, %5, %cst_5 [1] : vector<8x128xf32> to vector<8xf32>
    %7 = vector.shape_cast %6 : vector<8xf32> to vector<8x1xf32>
    %8 = vector.broadcast %7 : vector<8x1xf32> to vector<8x128xf32>
    %9 = arith.subf %5, %8 : vector<8x128xf32>
    %10 = math.exp %9 : vector<8x128xf32>
    %cst_6 = arith.constant dense<0.000000e+00> : vector<8xf32>
    %11 = vector.multi_reduction <add>, %10, %cst_6 [1] : vector<8x128xf32> to vector<8xf32>
    %12 = vector.shape_cast %11 : vector<8xf32> to vector<8x1xf32>
    %13 = math.log %12 : vector<8x1xf32>
    %c0_7 = arith.constant 0 : index
    %c0_8 = arith.constant 0 : index
    %14 = vector.load %arg4[%c0_7, %c0_8] : memref<8x128xf32, #tpu.memory_space<vmem>>, vector<8x128xf32>
    %15 = arith.addf %5, %14 : vector<8x128xf32>
    %cst_9 = arith.constant dense<0xFF800000> : vector<8xf32>
    %16 = vector.multi_reduction <maximumf>, %15, %cst_9 [1] : vector<8x128xf32> to vector<8xf32>
    %17 = vector.shape_cast %16 : vector<8xf32> to vector<8x1xf32>
    %18 = tpu.iota {dimensions = array<i32: 1>} : vector<8x128xi32>
    %19 = vector.broadcast %17 : vector<8x1xf32> to vector<8x128xf32>
    %20 = arith.cmpf oge, %15, %19 : vector<8x128xf32>
    %c128_i32 = arith.constant 128 : i32
    %21 = vector.broadcast %c128_i32 : i32 to vector<8x128xi32>
    %22 = arith.select %20, %18, %21 : vector<8x128xi1>, vector<8x128xi32>
    %cst_10 = arith.constant dense<2147483647> : vector<8xi32>
    %23 = vector.multi_reduction <minsi>, %22, %cst_10 [1] : vector<8x128xi32> to vector<8xi32>
    %24 = vector.shape_cast %23 : vector<8xi32> to vector<8x1xi32>
    %25 = vector.broadcast %24 : vector<8x1xi32> to vector<8x128xi32>
    %26 = arith.cmpi eq, %18, %25 : vector<8x128xi32>
    %cst_11 = arith.constant 0.000000e+00 : f32
    %27 = vector.broadcast %cst_11 : f32 to vector<8x128xf32>
    %28 = arith.select %26, %5, %27 : vector<8x128xi1>, vector<8x128xf32>
    %cst_12 = arith.constant dense<0.000000e+00> : vector<8xf32>
    %29 = vector.multi_reduction <add>, %28, %cst_12 [1] : vector<8x128xf32> to vector<8xf32>
    %30 = vector.shape_cast %29 : vector<8xf32> to vector<8x1xf32>
    %31 = arith.subf %30, %7 : vector<8x1xf32>
    %32 = arith.subf %31, %13 : vector<8x1xf32>
    %c0_13 = arith.constant 0 : index
    %c0_14 = arith.constant 0 : index
    %33 = vector.load %arg5[%c0_13, %c0_14] : memref<8x1xi32, #tpu.memory_space<vmem>>, vector<8x1xi32>
    tpu.vector_store %arg5[%c0_13, %c0_14], %24 {strides = array<i32>} : memref<8x1xi32, #tpu.memory_space<vmem>>, vector<8x1xi32>,
    %c0_15 = arith.constant 0 : index
    %c0_16 = arith.constant 0 : index
    %34 = vector.load %arg6[%c0_15, %c0_16] : memref<8x1xf32, #tpu.memory_space<vmem>>, vector<8x1xf32>
    tpu.vector_store %arg6[%c0_15, %c0_16], %32 {strides = array<i32>} : memref<8x1xf32, #tpu.memory_space<vmem>>, vector<8x1xf32>,
    return
  }
  func.func @transform_0(%arg0: i32) -> (i32, i32) {
    %c0_i32 = arith.constant 0 : i32
    %c0_i32_0 = arith.constant 0 : i32
    return %arg0, %c0_i32 : i32, i32
  }
  func.func @transform_1(%arg0: i32) -> (i32, i32) {
    %c0_i32 = arith.constant 0 : i32
    %c0_i32_0 = arith.constant 0 : i32
    %c0_i32_1 = arith.constant 0 : i32
    return %c0_i32, %c0_i32_0 : i32, i32
  }
  func.func @transform_2(%arg0: i32) -> (i32, i32) {
    %c0_i32 = arith.constant 0 : i32
    %c0_i32_0 = arith.constant 0 : i32
    %c0_i32_1 = arith.constant 0 : i32
    return %c0_i32, %c0_i32_0 : i32, i32
  }
  func.func @transform_3(%arg0: i32) -> (i32, i32) {
    %c0_i32 = arith.constant 0 : i32
    %c0_i32_0 = arith.constant 0 : i32
    return %arg0, %c0_i32 : i32, i32
  }
  func.func @transform_4(%arg0: i32) -> (i32, i32) {
    %c0_i32 = arith.constant 0 : i32
    %c0_i32_0 = arith.constant 0 : i32
    return %arg0, %c0_i32 : i32, i32
  }
  func.func @transform_5(%arg0: i32) -> (i32, i32) {
    %c0_i32 = arith.constant 0 : i32
    %c0_i32_0 = arith.constant 0 : i32
    return %arg0, %c0_i32 : i32, i32
  }
}

</mosaic_0001>

<llo_original>
// kernel: act_layer_forward.1
$region0: #{act_layer_forward.1}
  #allocation0 [shape = 'u32[]', space=smem, size = 0x4, offset = 0x4, fixed_abs, tag = 'smem constant byte address 0x4 - core index']
  #allocation1 [shape = 'u32[144,128]{1,0:T(1,128)}', space=vmem, size = 0x12000, scoped, tag = 'internal scratch']
  %s0 = inlined_call_operand.vmem [shape: f32[8,32], index: 0, kind: input, shape index: {}]
  %s1 = inlined_call_operand.vmem [shape: f32[32,128], index: 1, kind: input, shape index: {}]
  %s2 = inlined_call_operand.vmem [shape: f32[1,128], index: 2, kind: input, shape index: {}]
  %s3 = inlined_call_operand.vmem [shape: f32[8,128], index: 3, kind: input, shape index: {}]
  %s4 = inlined_call_operand.vmem [shape: s32[8,1], index: 4, kind: output, shape index: {0}]
  %s5 = inlined_call_operand.vmem [shape: f32[8,1], index: 5, kind: output, shape index: {1}]
  %6 = xla_tuple %s4, %s5
  %s7 = sld [smem:[#allocation0]]
  $region34: #{act_layer_forward.1} parent=0
    _
  %s9 = ssub.s32 1, %s7
  %s10 = scalar_select 0, %s9, %s7
  // Predicated region
  $region2: #{act_layer_forward.1} parent=0 // pred_check
    _
  $region3: #{act_layer_forward.1} parent=0 // pred_check_branch
    %12 = sbr.rel (0) target = $region5
  $region4: #{act_layer_forward.1} parent=0 // pred_region
    _
  $region5: #{act_layer_forward.1} parent=0 // pred_fallthru
    _
  // Predicated region
  $region6: #{act_layer_forward.1} parent=0 // pred_check
    _
  $region7: #{act_layer_forward.1} parent=0 // pred_check_branch
    %14 = sbr.rel (0) target = $region9
  $region8: #{act_layer_forward.1} parent=0 // pred_region
    _
  $region9: #{act_layer_forward.1} parent=0 // pred_fallthru
    _
  // Predicated region
  $region10: #{act_layer_forward.1} parent=0 // pred_check
    _
  $region11: #{act_layer_forward.1} parent=0 // pred_check_branch
    %16 = sbr.rel (0) target = $region13
  $region12: #{act_layer_forward.1} parent=0 // pred_region
    _
  $region13: #{act_layer_forward.1} parent=0 // pred_fallthru
    _
  // Predicated region
  $region14: #{act_layer_forward.1} parent=0 // pred_check
    _
  $region15: #{act_layer_forward.1} parent=0 // pred_check_branch
    %18 = sbr.rel (0) target = $region17
  $region16: #{act_layer_forward.1} parent=0 // pred_region
    _
  $region17: #{act_layer_forward.1} parent=0 // pred_fallthru
    _
  %v19 = vld [vmem:[%s0] sm:$0xff]
  %v20 = vld [vmem:[%s1] sm:$0xff]
  %v21 = vld [vmem:[%s1 + $0x8] sm:$0xff]
  %v22 = vld [vmem:[%s1 + $0x10] sm:$0xff]
  %v23 = vld [vmem:[%s1 + $0x18] sm:$0xff]
  %v24 = vld [vmem:[%s2] sm:$0x1]
  %v26 = vlaneseq
  %v27 = vshrl.u32 %v26, 7
  %v28 = vsub.s32 0, %v27
  %v29 = vrot.slane %v24, %v28
  %vm31 = vcmask 261120
  %v33 = vsel %vm31, %v19, 0
  %35 = vmatprep.subr.mxu0 0.0
  %36 = vmatpush1.msra.mxu0 0.0
  %37 = vmatprep.subr.mxu0 0.0
  %38 = vmatpush1.msra.mxu0 0.0
  %39 = vmatprep.subr.mxu0 0.0
  %40 = vmatpush1.msra.mxu0 0.0
  %41 = vmatprep.subr.mxu0 0.0
  %42 = vmatpush1.msra.mxu0 0.0
  %43 = vmatprep.subr.mxu0 0.0
  %44 = vmatpush1.msra.mxu0 0.0
  %45 = vmatprep.subr.mxu0 0.0
  %46 = vmatpush1.msra.mxu0 0.0
  %47 = vmatprep.subr.mxu0 0.0
  %48 = vmatpush1.msra.mxu0 0.0
  %49 = vmatprep.subr.mxu0 0.0
  %50 = vmatpush1.msra.mxu0 0.0
  %51 = vmatprep.subr.mxu0 0.0
  %52 = vmatpush1.msra.mxu0 0.0
  %53 = vmatprep.subr.mxu0 0.0
  %54 = vmatpush1.msra.mxu0 0.0
  %55 = vmatprep.subr.mxu0 0.0
  %56 = vmatpush1.msra.mxu0 0.0
  %57 = vmatprep.subr.mxu0 0.0
  %58 = vmatpush1.msra.mxu0 0.0
  %59 = vmatprep.subr.mxu0 0.0
  %60 = vmatpush1.msra.mxu0 %v23
  %61 = vmatprep.subr.mxu0 0.0
  %62 = vmatpush1.msra.mxu0 %v22
  %63 = vmatprep.subr.mxu0 0.0
  %64 = vmatpush1.msra.mxu0 %v21
  %65 = vmatprep.subr.mxu0 0.0
  %66 = vmatpush1.msra.mxu0 %v20
  %67 = vmatprep.subr.mxu0 0.0
  %68 = vmatpush2.msra.mxu0 0.0
  %69 = vmatprep.subr.mxu0 0.0
  %70 = vmatpush2.msra.mxu0 0.0
  %71 = vmatprep.subr.mxu0 0.0
  %72 = vmatpush2.msra.mxu0 0.0
  %73 = vmatprep.subr.mxu0 0.0
  %74 = vmatpush2.msra.mxu0 0.0
  %75 = vmatprep.subr.mxu0 0.0
  %76 = vmatpush2.msra.mxu0 0.0
  %77 = vmatprep.subr.mxu0 0.0
  %78 = vmatpush2.msra.mxu0 0.0
  %79 = vmatprep.subr.mxu0 0.0
  %80 = vmatpush2.msra.mxu0 0.0
  %81 = vmatprep.subr.mxu0 0.0
  %82 = vmatpush2.msra.mxu0 0.0
  %83 = vmatprep.subr.mxu0 0.0
  %84 = vmatpush2.msra.mxu0 0.0
  %85 = vmatprep.subr.mxu0 0.0
  %86 = vmatpush2.msra.mxu0 0.0
  %87 = vmatprep.subr.mxu0 0.0
  %88 = vmatpush2.msra.mxu0 0.0
  %89 = vmatprep.subr.mxu0 0.0
  %90 = vmatpush2.msra.mxu0 0.0
  %91 = vmatprep.subr.mxu0 0.0
  %92 = vmatpush2.msra.mxu0 0.0
  %93 = vmatprep.subr.mxu0 0.0
  %94 = vmatpush2.msra.mxu0 0.0
  %95 = vmatprep.subr.mxu0 0.0
  %96 = vmatpush2.msra.mxu0 0.0
  %97 = vmatprep.subr.mxu0 0.0
  %98 = vmatpush2.msra.mxu0 0.0
  %99 = vmatprep.mubr.f32.mxu0 0.0
  %100 = vmatmul.mubr.f32.gmra.mxu0 %v33
  %v101 = vpop.f32.mrf.mxu0
  %v102 = vadd.f32 %v29, %v101
  %v103 = vpop.f32.mrf.mxu0
  %104 = vdwg.mxu0
  %105 = vmax.xlane.f32.xlu0 %v102
  %v106 = vpop.xlane.xlu0 %105
  %v107 = vsub.f32 %v102, %v106
  %v108 = vmul.f32 %v107, 1.442695
  %v109 = vpow.pop %v108
  %110 = vadd.xlane.f32.xlu0 %v109
  %v111 = vpop.xlane.xlu0 %110
  %v112 = vlog2.pop %v111
  %v113 = vmul.f32 %v112, 0.6931472
  %v114 = vld [vmem:[%s3] sm:$0xff]
  %v115 = vadd.f32 %v102, %v114
  %116 = vmax.xlane.f32.xlu0 %v115
  %v117 = vpop.xlane.xlu0 %116
  %v118 = vlaneseq
  %v119 = vand.u32 %v118, 127
  %vm120 = vcmp.ge.f32.partialorder %v115, %v117
  %v121 = vsel %vm120, %v119, 128
  %v122 = vand.u32 %v121, 65535
  %v123 = vshra.s32 %v121, 16
  %v124 = vcvt.s32.f32 %v122
  %v125 = vcvt.s32.f32 %v123
  %126 = vmin.xlane.f32.xlu0 %v125
  %v127 = vpop.xlane.xlu0 %126
  %vm128 = vcmp.eq.f32.partialorder %v125, %v127
  %v129 = vsel %vm128, %v124, inf
  %130 = vmin.xlane.f32.xlu0 %v129
  %v131 = vpop.xlane.xlu0 %130
  %v132 = vcvt.f32.s32 %v131
  %v133 = vcvt.f32.s32 %v127
  %v134 = vshll.u32 %v133, 16
  %v135 = vadd.s32 %v134, %v132
  %vm136 = vcmp.eq.s32.totalorder %v119, %v135
  %v137 = vsel %vm136, %v102, 0.0
  %138 = vadd.xlane.f32.xlu0 %v137
  %v139 = vpop.xlane.xlu0 %138
  %v140 = vsub.f32 %v139, %v106
  %v141 = vsub.f32 %v140, %v113
  %vm142 = vcmask 7168
  %143 = vst.msk [vmem:[%s4] sm:$0xff] %vm142, %v135
  %144 = vst.msk [vmem:[%s5] sm:$0xff] %vm142, %v141
  // Predicated region
  $region18: #{act_layer_forward.1} parent=0 // pred_check
    _
  $region19: #{act_layer_forward.1} parent=0 // pred_check_branch
    %146 = sbr.rel (0) target = $region21
  $region20: #{act_layer_forward.1} parent=0 // pred_region
    _
  $region21: #{act_layer_forward.1} parent=0 // pred_fallthru
    _
  // Predicated region
  $region22: #{act_layer_forward.1} parent=0 // pred_check
    _
  $region23: #{act_layer_forward.1} parent=0 // pred_check_branch
    %148 = sbr.rel (0) target = $region25
  $region24: #{act_layer_forward.1} parent=0 // pred_region
    _
  $region25: #{act_layer_forward.1} parent=0 // pred_fallthru
    _
  // Predicated region
  $region26: #{act_layer_forward.1} parent=0 // pred_check
    _
  $region27: #{act_layer_forward.1} parent=0 // pred_check_branch
    %150 = sbr.rel (0) target = $region29
  $region28: #{act_layer_forward.1} parent=0 // pred_region
    _
  $region29: #{act_layer_forward.1} parent=0 // pred_fallthru
    _
  // Predicated region
  $region30: #{act_layer_forward.1} parent=0 // pred_check
    _
  $region31: #{act_layer_forward.1} parent=0 // pred_check_branch
    %152 = sbr.rel (0) target = $region33
  $region32: #{act_layer_forward.1} parent=0 // pred_region
    _
  $region33: #{act_layer_forward.1} parent=0 // pred_fallthru
    _

</llo_original>
